<compile_context>
chip_gen: v7x
topology: tpu7x:2x2x1
jax: 0.10.0
libtpu: 0.0.40
codegen_flags: <defaults>
</compile_context>

<pallas_src>
import functools

import jax
import jax.numpy as jnp
from jax import lax
from jax.experimental import pallas as pl
from jax.experimental.pallas import tpu as pltpu

_LANE = 128


def _lploss_kernel(x_ref, y_ref, sdiff_ref, sy_ref, *, p, nrows, trows,
                   tiles_per_core):
    c = pl.program_id(0)   # core / feature-range split ("parallel")
    t = pl.program_id(1)   # row tile within this core's range ("arbitrary")

    # Resident (B, 128) lane-partial accumulators (output block index depends
    # only on c): zero them on the first tile of each core's range.
    @pl.when(t == 0)
    def _():
        sdiff_ref[...] = jnp.zeros_like(sdiff_ref)
        sy_ref[...] = jnp.zeros_like(sy_ref)

    row0 = (c * tiles_per_core + t) * trows   # unclamped global row offset

    def _pow(v):
        # Keep |.|^p on the VPU for integer p; EUP pow only for non-integer p.
        if p == 2:
            return v * v
        if p == 1:
            return jnp.abs(v)
        if isinstance(p, int) and 1 < p <= 8:
            a = jnp.abs(v)
            out = a
            for _ in range(p - 1):
                out = out * a
            return out
        return jnp.abs(v) ** float(p)

    def _accumulate(masked):
        x = x_ref[...].astype(jnp.float32)
        y = y_ref[...].astype(jnp.float32)
        d = x - y
        if masked:
            # Rows beyond nrows (ragged last tile / clamped out-of-range tiles)
            # contribute zero to both sums.  Mask uses the *unclamped* row0.
            row = lax.broadcasted_iota(jnp.int32, x.shape, 1)
            valid = (row + row0) < nrows
            d = jnp.where(valid, d, 0.0)
            y = jnp.where(valid, y, 0.0)
        # Reduce only over the rows (sublane) axis per tile; the cross-lane
        # reduce happens once in the epilogue.
        sdiff_ref[...] += jnp.sum(_pow(d), axis=1)
        sy_ref[...] += jnp.sum(_pow(y), axis=1)

    full = (row0 + trows) <= nrows

    @pl.when(full)
    def _():
        _accumulate(False)      # steady-state fast path: no mask ops

    @pl.when(jnp.logical_not(full))
    def _():
        _accumulate(True)       # ragged / out-of-range tiles only


def _pick_num_cores():
    """2-way megacore split only where it helps (v7x has 2 TCs per chip)."""
    try:
        kind = jax.devices()[0].device_kind.lower()
    except Exception:
        return 1
    return 2 if ("v7" in kind or "7x" in kind) else 1


def _choose_trows(b, nrows, itemsize, pack,
                  target_bytes=4 * 1024 * 1024,
                  input_budget_bytes=40 * 1024 * 1024):
    """Row-tile size: ~4 MiB of actual data per input block, capped so
    2 inputs x 2 pipeline buffers stay within the input budget (safe on
    v5e/v6e/v7x)."""
    row_bytes = b * _LANE * itemsize
    cap = max(pack, (input_budget_bytes // (4 * row_bytes)) // pack * pack)
    trows = max(pack, (target_bytes // row_bytes) // pack * pack)
    trows = min(trows, cap)
    if trows >= nrows:
        return nrows            # full dim: allowed even if not pack-aligned
    return trows


def lp_loss(x, y, p=2, reduction="mean", trows=None, num_cores=None):
    """Pallas equivalent of LPLoss.forward(x, y) (relative L^p error)."""
    assert x.shape == y.shape
    b = x.shape[0]
    xf = x.reshape(b, -1)
    yf = y.reshape(b, -1)
    n = xf.shape[1]

    # Lane-pack the feature axis: (B, nrows, 128).  Zero-pad only when N is
    # not a multiple of 128 (zeros add nothing to either norm).
    if n % _LANE != 0:
        pad = _LANE - n % _LANE
        xf = jnp.pad(xf, ((0, 0), (0, pad)))
        yf = jnp.pad(yf, ((0, 0), (0, pad)))
    nrows = xf.shape[1] // _LANE
    x3 = xf.reshape(b, nrows, _LANE)
    y3 = yf.reshape(b, nrows, _LANE)

    itemsize = jnp.dtype(x3.dtype).itemsize
    pack = max(8, 32 // itemsize)     # sublane packing: 8 f32, 16 bf16, 32 i8
    if trows is None:
        trows = _choose_trows(b, nrows, itemsize, pack)
    else:
        trows = min(nrows, max(pack, (trows // pack) * pack))

    ntiles = pl.cdiv(nrows, trows)
    if num_cores is None:
        num_cores = _pick_num_cores()
    ncores = max(1, min(num_cores, ntiles))
    tiles_per_core = pl.cdiv(ntiles, ncores)

    def in_idx(c, t):
        j = c * tiles_per_core + t
        if ncores * tiles_per_core != ntiles:
            # Rare (only when the v7x split does not divide ntiles): clamp to
            # a valid block; the kernel masks it out via the unclamped row0.
            j = jnp.minimum(j, ntiles - 1)
        return (0, j, 0)

    kernel = functools.partial(
        _lploss_kernel, p=p, nrows=nrows, trows=trows,
        tiles_per_core=tiles_per_core)

    block_bytes = b * trows * _LANE * itemsize
    vmem_limit = int(min(48 * 1024 * 1024,
                         max(32 * 1024 * 1024,
                             4 * block_bytes + (8 << 20))))

    sdiff_parts, sy_parts = pl.pallas_call(
        kernel,
        out_shape=(
            jax.ShapeDtypeStruct((ncores, b, _LANE), jnp.float32),
            jax.ShapeDtypeStruct((ncores, b, _LANE), jnp.float32),
        ),
        grid_spec=pltpu.PrefetchScalarGridSpec(
            num_scalar_prefetch=0,
            grid=(ncores, tiles_per_core),
            in_specs=[
                pl.BlockSpec((b, trows, _LANE), in_idx),
                pl.BlockSpec((b, trows, _LANE), in_idx),
            ],
            out_specs=(
                pl.BlockSpec((None, b, _LANE), lambda c, t: (c, 0, 0)),
                pl.BlockSpec((None, b, _LANE), lambda c, t: (c, 0, 0)),
            ),
        ),
        compiler_params=pltpu.CompilerParams(
            dimension_semantics=("parallel", "arbitrary"),
            vmem_limit_bytes=vmem_limit,
        ),
    )(x3, y3)

    # Tiny epilogue on (ncores, B, 128) f32: combine cores + lanes, p-th root,
    # ratio, then reduce.
    sdiff = jnp.sum(sdiff_parts, axis=(0, 2))          # (B,)
    sy = jnp.sum(sy_parts, axis=(0, 2))                # (B,)
    if p == 2:
        ratios = jnp.sqrt(sdiff / sy)
    else:
        ratios = (sdiff / sy) ** (1.0 / float(p))

    if reduction == "mean":
        return jnp.mean(ratios)
    elif reduction == "none":
        return ratios
    else:
        raise ValueError("Only reductions 'mean' and 'none' supported!")


def _lp_loss_ref(x, y, p=2, reduction="mean"):
    b = x.shape[0]
    xf = x.reshape(b, -1)
    yf = y.reshape(b, -1)
    diff_norms = jnp.sum(jnp.abs(xf - yf) ** p, axis=1) ** (1.0 / p)
    y_norms = jnp.sum(jnp.abs(yf) ** p, axis=1) ** (1.0 / p)
    r = diff_norms / y_norms
    return jnp.mean(r) if reduction == "mean" else r


if __name__ == "__main__":
    key = jax.random.PRNGKey(0)
    kx, ky = jax.random.split(key)

    # Shapes consistent with field prediction: (B, C, H, W)
    x = jax.random.normal(kx, (2, 4, 16, 16), dtype=jnp.float32)
    y = jax.random.normal(ky, (2, 4, 16, 16), dtype=jnp.float32) + 0.5

    out_mean = jax.block_until_ready(lp_loss(x, y, p=2, reduction="mean"))
    out_none = jax.block_until_ready(lp_loss(x, y, p=2, reduction="none"))
    ref_mean = _lp_loss_ref(x, y, p=2, reduction="mean")
    ref_none = _lp_loss_ref(x, y, p=2, reduction="none")
    assert jnp.allclose(out_mean, ref_mean, rtol=1e-5, atol=1e-6), (out_mean, ref_mean)
    assert jnp.allclose(out_none, ref_none, rtol=1e-5, atol=1e-6), (out_none, ref_none)

    # Ragged feature dim (N % 128 != 0): exercises the zero-pad path.
    x2 = jax.random.normal(kx, (2, 3, 17, 19), dtype=jnp.float32)
    y2 = jax.random.normal(ky, (2, 3, 17, 19), dtype=jnp.float32) + 0.25
    out2 = jax.block_until_ready(lp_loss(x2, y2, p=2, reduction="none"))
    ref2 = _lp_loss_ref(x2, y2, p=2, reduction="none")
    assert jnp.allclose(out2, ref2, rtol=1e-5, atol=1e-6), (out2, ref2)

    # Ragged row tiling: nrows=10, trows=8 -> last tile partially masked.
    x3 = jax.random.normal(kx, (2, 5, 16, 16), dtype=jnp.float32)
    y3 = jax.random.normal(ky, (2, 5, 16, 16), dtype=jnp.float32) + 0.25
    out3 = jax.block_until_ready(lp_loss(x3, y3, p=2, reduction="none", trows=8))
    ref3 = _lp_loss_ref(x3, y3, p=2, reduction="none")
    assert jnp.allclose(out3, ref3, rtol=1e-5, atol=1e-6), (out3, ref3)

    # Forced 2-core split with ntiles=3: exercises the clamped + masked tile
    # and the cross-core combine (runs on 1-TC chips too, just serialized).
    x4 = jax.random.normal(kx, (2, 4, 24, 32), dtype=jnp.float32)
    y4 = jax.random.normal(ky, (2, 4, 24, 32), dtype=jnp.float32) + 0.5
    out4 = jax.block_until_ready(
        lp_loss(x4, y4, p=2, reduction="none", trows=8, num_cores=2))
    ref4 = _lp_loss_ref(x4, y4, p=2, reduction="none")
    assert jnp.allclose(out4, ref4, rtol=1e-5, atol=1e-6), (out4, ref4)

    # Integer p != 2 stays on the VPU (no EUP pow).
    out5 = jax.block_until_ready(lp_loss(x2, y2, p=3, reduction="mean", trows=8))
    ref5 = _lp_loss_ref(x2, y2, p=3, reduction="mean")
    assert jnp.allclose(out5, ref5, rtol=1e-5, atol=1e-6), (out5, ref5)

    # bf16 inputs stay bf16 into the kernel (halved HBM read traffic),
    # accumulated in f32 inside.
    xb = x.astype(jnp.bfloat16)
    yb = y.astype(jnp.bfloat16)
    outb = jax.block_until_ready(lp_loss(xb, yb, p=2, reduction="mean"))
    refb = _lp_loss_ref(xb.astype(jnp.float32), yb.astype(jnp.float32),
                        p=2, reduction="mean")
    assert jnp.allclose(outb, refb, rtol=1e-4, atol=1e-5), (outb, refb)

    print("KERNEL_OK")
</pallas_src>

<mosaic_0001>
module attributes {stable_mosaic.version = 11 : i64} {
  func.func @_lploss_kernel(%arg0: i32, %arg1: i32, %arg2: memref<2x8x128xf32, #tpu.memory_space<vmem>>, %arg3: memref<2x8x128xf32, #tpu.memory_space<vmem>>, %arg4: memref<1x2x128xf32, #tpu.memory_space<vmem>>, %arg5: memref<1x2x128xf32, #tpu.memory_space<vmem>>) attributes {dimension_semantics = [#tpu.dimension_semantics<parallel>, #tpu.dimension_semantics<arbitrary>], iteration_bounds = array<i64: 1, 1>, scalar_prefetch = 0 : i64, scratch_operands = 0 : i64, tpu.core_type = #tpu.core_type<tc>, window_params = [{transform_indices = @transform_0, window_bounds = array<i64: 2, 8, 128>}, {transform_indices = @transform_1, window_bounds = array<i64: 2, 8, 128>}, {transform_indices = @transform_2, window_bounds = array<i64: 1, 2, 128>}, {transform_indices = @transform_3, window_bounds = array<i64: 1, 2, 128>}]} {
    %c0_i32 = arith.constant 0 : i32
    %0 = arith.cmpi eq, %arg1, %c0_i32 : i32
    %1 = arith.extui %0 : i1 to i32
    %c0_i32_0 = arith.constant 0 : i32
    %2 = arith.cmpi ne, %1, %c0_i32_0 : i32
    scf.if %2 {
      %cst = arith.constant 0.000000e+00 : f32
      %13 = vector.broadcast %cst : f32 to vector<2x128xf32>
      %c0 = arith.constant 0 : index
      %c0_5 = arith.constant 0 : index
      %c0_6 = arith.constant 0 : index
      %14 = vector.load %arg4[%c0, %c0_5, %c0_6] : memref<1x2x128xf32, #tpu.memory_space<vmem>>, vector<1x2x128xf32>
      %15 = vector.shape_cast %14 : vector<1x2x128xf32> to vector<2x128xf32>
      %16 = vector.shape_cast %13 : vector<2x128xf32> to vector<1x2x128xf32>
      tpu.vector_store %arg4[%c0, %c0_5, %c0_6], %16 {strides = array<i32>} : memref<1x2x128xf32, #tpu.memory_space<vmem>>, vector<1x2x128xf32>,
      %cst_7 = arith.constant 0.000000e+00 : f32
      %17 = vector.broadcast %cst_7 : f32 to vector<2x128xf32>
      %c0_8 = arith.constant 0 : index
      %c0_9 = arith.constant 0 : index
      %c0_10 = arith.constant 0 : index
      %18 = vector.load %arg5[%c0_8, %c0_9, %c0_10] : memref<1x2x128xf32, #tpu.memory_space<vmem>>, vector<1x2x128xf32>
      %19 = vector.shape_cast %18 : vector<1x2x128xf32> to vector<2x128xf32>
      %20 = vector.shape_cast %17 : vector<2x128xf32> to vector<1x2x128xf32>
      tpu.vector_store %arg5[%c0_8, %c0_9, %c0_10], %20 {strides = array<i32>} : memref<1x2x128xf32, #tpu.memory_space<vmem>>, vector<1x2x128xf32>,
    } else {
    }
    %c1_i32 = arith.constant 1 : i32
    %3 = arith.muli %arg0, %c1_i32 : i32
    %4 = arith.addi %3, %arg1 : i32
    %c8_i32 = arith.constant 8 : i32
    %5 = arith.muli %4, %c8_i32 : i32
    %c8_i32_1 = arith.constant 8 : i32
    %6 = arith.addi %5, %c8_i32_1 : i32
    %c8_i32_2 = arith.constant 8 : i32
    %7 = arith.cmpi sle, %6, %c8_i32_2 : i32
    %8 = arith.extui %7 : i1 to i32
    %c0_i32_3 = arith.constant 0 : i32
    %9 = arith.cmpi ne, %8, %c0_i32_3 : i32
    scf.if %9 {
      %c0 = arith.constant 0 : index
      %c0_5 = arith.constant 0 : index
      %c0_6 = arith.constant 0 : index
      %13 = vector.load %arg2[%c0, %c0_5, %c0_6] : memref<2x8x128xf32, #tpu.memory_space<vmem>>, vector<2x8x128xf32>
      %c0_7 = arith.constant 0 : index
      %c0_8 = arith.constant 0 : index
      %c0_9 = arith.constant 0 : index
      %14 = vector.load %arg3[%c0_7, %c0_8, %c0_9] : memref<2x8x128xf32, #tpu.memory_space<vmem>>, vector<2x8x128xf32>
      %15 = arith.subf %13, %14 : vector<2x8x128xf32>
      %c0_10 = arith.constant 0 : index
      %c0_11 = arith.constant 0 : index
      %c0_12 = arith.constant 0 : index
      %16 = vector.load %arg4[%c0_10, %c0_11, %c0_12] : memref<1x2x128xf32, #tpu.memory_space<vmem>>, vector<1x2x128xf32>
      %17 = vector.shape_cast %16 : vector<1x2x128xf32> to vector<2x128xf32>
      %18 = arith.mulf %15, %15 : vector<2x8x128xf32>
      %cst = arith.constant dense<0.000000e+00> : vector<2x128xf32>
      %19 = vector.multi_reduction <add>, %18, %cst [1] : vector<2x8x128xf32> to vector<2x128xf32>
      %20 = arith.addf %17, %19 : vector<2x128xf32>
      %c0_13 = arith.constant 0 : index
      %c0_14 = arith.constant 0 : index
      %c0_15 = arith.constant 0 : index
      %21 = vector.load %arg4[%c0_13, %c0_14, %c0_15] : memref<1x2x128xf32, #tpu.memory_space<vmem>>, vector<1x2x128xf32>
      %22 = vector.shape_cast %21 : vector<1x2x128xf32> to vector<2x128xf32>
      %23 = vector.shape_cast %20 : vector<2x128xf32> to vector<1x2x128xf32>
      tpu.vector_store %arg4[%c0_13, %c0_14, %c0_15], %23 {strides = array<i32>} : memref<1x2x128xf32, #tpu.memory_space<vmem>>, vector<1x2x128xf32>,
      %c0_16 = arith.constant 0 : index
      %c0_17 = arith.constant 0 : index
      %c0_18 = arith.constant 0 : index
      %24 = vector.load %arg5[%c0_16, %c0_17, %c0_18] : memref<1x2x128xf32, #tpu.memory_space<vmem>>, vector<1x2x128xf32>
      %25 = vector.shape_cast %24 : vector<1x2x128xf32> to vector<2x128xf32>
      %26 = arith.mulf %14, %14 : vector<2x8x128xf32>
      %cst_19 = arith.constant dense<0.000000e+00> : vector<2x128xf32>
      %27 = vector.multi_reduction <add>, %26, %cst_19 [1] : vector<2x8x128xf32> to vector<2x128xf32>
      %28 = arith.addf %25, %27 : vector<2x128xf32>
      %c0_20 = arith.constant 0 : index
      %c0_21 = arith.constant 0 : index
      %c0_22 = arith.constant 0 : index
      %29 = vector.load %arg5[%c0_20, %c0_21, %c0_22] : memref<1x2x128xf32, #tpu.memory_space<vmem>>, vector<1x2x128xf32>
      %30 = vector.shape_cast %29 : vector<1x2x128xf32> to vector<2x128xf32>
      %31 = vector.shape_cast %28 : vector<2x128xf32> to vector<1x2x128xf32>
      tpu.vector_store %arg5[%c0_20, %c0_21, %c0_22], %31 {strides = array<i32>} : memref<1x2x128xf32, #tpu.memory_space<vmem>>, vector<1x2x128xf32>,
    } else {
    }
    %true = arith.constant true
    %10 = arith.xori %7, %true : i1
    %11 = arith.extui %10 : i1 to i32
    %c0_i32_4 = arith.constant 0 : i32
    %12 = arith.cmpi ne, %11, %c0_i32_4 : i32
    scf.if %12 {
      %c0 = arith.constant 0 : index
      %c0_5 = arith.constant 0 : index
      %c0_6 = arith.constant 0 : index
      %13 = vector.load %arg2[%c0, %c0_5, %c0_6] : memref<2x8x128xf32, #tpu.memory_space<vmem>>, vector<2x8x128xf32>
      %c0_7 = arith.constant 0 : index
      %c0_8 = arith.constant 0 : index
      %c0_9 = arith.constant 0 : index
      %14 = vector.load %arg3[%c0_7, %c0_8, %c0_9] : memref<2x8x128xf32, #tpu.memory_space<vmem>>, vector<2x8x128xf32>
      %15 = arith.subf %13, %14 : vector<2x8x128xf32>
      %16 = tpu.iota {dimensions = array<i32: 1>} : vector<2x8x128xi32>
      %17 = vector.broadcast %5 : i32 to vector<2x8x128xi32>
      %18 = arith.addi %16, %17 : vector<2x8x128xi32>
      %c8_i32_10 = arith.constant 8 : i32
      %19 = vector.broadcast %c8_i32_10 : i32 to vector<2x8x128xi32>
      %20 = arith.cmpi slt, %18, %19 : vector<2x8x128xi32>
      %cst = arith.constant 0.000000e+00 : f32
      %21 = vector.broadcast %cst : f32 to vector<2x8x128xf32>
      %22 = arith.select %20, %15, %21 : vector<2x8x128xi1>, vector<2x8x128xf32>
      %cst_11 = arith.constant 0.000000e+00 : f32
      %23 = vector.broadcast %cst_11 : f32 to vector<2x8x128xf32>
      %24 = arith.select %20, %14, %23 : vector<2x8x128xi1>, vector<2x8x128xf32>
      %c0_12 = arith.constant 0 : index
      %c0_13 = arith.constant 0 : index
      %c0_14 = arith.constant 0 : index
      %25 = vector.load %arg4[%c0_12, %c0_13, %c0_14] : memref<1x2x128xf32, #tpu.memory_space<vmem>>, vector<1x2x128xf32>
      %26 = vector.shape_cast %25 : vector<1x2x128xf32> to vector<2x128xf32>
      %27 = arith.mulf %22, %22 : vector<2x8x128xf32>
      %cst_15 = arith.constant dense<0.000000e+00> : vector<2x128xf32>
      %28 = vector.multi_reduction <add>, %27, %cst_15 [1] : vector<2x8x128xf32> to vector<2x128xf32>
      %29 = arith.addf %26, %28 : vector<2x128xf32>
      %c0_16 = arith.constant 0 : index
      %c0_17 = arith.constant 0 : index
      %c0_18 = arith.constant 0 : index
      %30 = vector.load %arg4[%c0_16, %c0_17, %c0_18] : memref<1x2x128xf32, #tpu.memory_space<vmem>>, vector<1x2x128xf32>
      %31 = vector.shape_cast %30 : vector<1x2x128xf32> to vector<2x128xf32>
      %32 = vector.shape_cast %29 : vector<2x128xf32> to vector<1x2x128xf32>
      tpu.vector_store %arg4[%c0_16, %c0_17, %c0_18], %32 {strides = array<i32>} : memref<1x2x128xf32, #tpu.memory_space<vmem>>, vector<1x2x128xf32>,
      %c0_19 = arith.constant 0 : index
      %c0_20 = arith.constant 0 : index
      %c0_21 = arith.constant 0 : index
      %33 = vector.load %arg5[%c0_19, %c0_20, %c0_21] : memref<1x2x128xf32, #tpu.memory_space<vmem>>, vector<1x2x128xf32>
      %34 = vector.shape_cast %33 : vector<1x2x128xf32> to vector<2x128xf32>
      %35 = arith.mulf %24, %24 : vector<2x8x128xf32>
      %cst_22 = arith.constant dense<0.000000e+00> : vector<2x128xf32>
      %36 = vector.multi_reduction <add>, %35, %cst_22 [1] : vector<2x8x128xf32> to vector<2x128xf32>
      %37 = arith.addf %34, %36 : vector<2x128xf32>
      %c0_23 = arith.constant 0 : index
      %c0_24 = arith.constant 0 : index
      %c0_25 = arith.constant 0 : index
      %38 = vector.load %arg5[%c0_23, %c0_24, %c0_25] : memref<1x2x128xf32, #tpu.memory_space<vmem>>, vector<1x2x128xf32>
      %39 = vector.shape_cast %38 : vector<1x2x128xf32> to vector<2x128xf32>
      %40 = vector.shape_cast %37 : vector<2x128xf32> to vector<1x2x128xf32>
      tpu.vector_store %arg5[%c0_23, %c0_24, %c0_25], %40 {strides = array<i32>} : memref<1x2x128xf32, #tpu.memory_space<vmem>>, vector<1x2x128xf32>,
    } else {
    }
    return
  }
  func.func @transform_0(%arg0: i32, %arg1: i32) -> (i32, i32, i32) {
    %c1_i32 = arith.constant 1 : i32
    %0 = arith.muli %arg0, %c1_i32 : i32
    %1 = arith.addi %0, %arg1 : i32
    %c0_i32 = arith.constant 0 : i32
    %c0_i32_0 = arith.constant 0 : i32
    %c0_i32_1 = arith.constant 0 : i32
    return %c0_i32, %1, %c0_i32_0 : i32, i32, i32
  }
  func.func @transform_1(%arg0: i32, %arg1: i32) -> (i32, i32, i32) {
    %c1_i32 = arith.constant 1 : i32
    %0 = arith.muli %arg0, %c1_i32 : i32
    %1 = arith.addi %0, %arg1 : i32
    %c0_i32 = arith.constant 0 : i32
    %c0_i32_0 = arith.constant 0 : i32
    %c0_i32_1 = arith.constant 0 : i32
    return %c0_i32, %1, %c0_i32_0 : i32, i32, i32
  }
  func.func @transform_2(%arg0: i32, %arg1: i32) -> (i32, i32, i32) {
    %c0_i32 = arith.constant 0 : i32
    %c0_i32_0 = arith.constant 0 : i32
    %c0_i32_1 = arith.constant 0 : i32
    return %arg0, %c0_i32, %c0_i32_0 : i32, i32, i32
  }
  func.func @transform_3(%arg0: i32, %arg1: i32) -> (i32, i32, i32) {
    %c0_i32 = arith.constant 0 : i32
    %c0_i32_0 = arith.constant 0 : i32
    %c0_i32_1 = arith.constant 0 : i32
    return %arg0, %c0_i32, %c0_i32_0 : i32, i32, i32
  }
}

</mosaic_0001>

<llo_original>
// kernel: tpu_custom_call.1
$region0: #{tpu_custom_call.1}
  #allocation0 [shape = 'u32[]', space=smem, size = 0x4, offset = 0x4, fixed_abs, tag = 'smem constant byte address 0x4 - core index']
  #allocation1 [shape = 'u32[144,128]{1,0:T(1,128)}', space=vmem, size = 0x12000, scoped, tag = 'internal scratch']
  %s0 = inlined_call_operand.hbm [shape: f32[2,8,128], index: 0, kind: input, shape index: {}]
  %s1 = inlined_call_operand.hbm [shape: f32[2,8,128], index: 1, kind: input, shape index: {}]
  %s2 = inlined_call_operand.hbm [shape: f32[1,2,128], index: 2, kind: output, shape index: {0}]
  %s3 = inlined_call_operand.hbm [shape: f32[1,2,128], index: 3, kind: output, shape index: {1}]
  %4 = xla_tuple %s2, %s3
  %s5 = sld [smem:[#allocation0]]
  $region46: #{tpu_custom_call.1} parent=0
    _
  %s7 = ssub.s32 1, %s5
  %s8 = scalar_select 0, %s7, %s5
  $region1: #{tpu_custom_call.1} parent=0
    #allocation2 [shape = 'u8[8192]{0}', space=vmem, size = 0x2000, scoped, tag = 'input window, operand 0, single buffered']
    #allocation3 [shape = 's32[1]{0}', space=sflag, size = 0x4, scoped, tag = 'scoped memory for tpu_custom_call.1']
    #allocation4 [shape = 's32[1]{0}', space=sflag, size = 0x4, scoped, tag = 'scoped memory for tpu_custom_call.1']
    #allocation5 [shape = 'u8[8192]{0}', space=vmem, size = 0x2000, scoped, tag = 'input window, operand 1, single buffered']
    #allocation6 [shape = 's32[1]{0}', space=sflag, size = 0x4, scoped, tag = 'scoped memory for tpu_custom_call.1']
    #allocation7 [shape = 'u8[1024]{0}', space=vmem, size = 0x400, scoped, tag = 'output window, operand 0, single buffered']
    #allocation8 [shape = 'u8[1024]{0}', space=vmem, size = 0x400, scoped, tag = 'output window, operand 1, single buffered']
    #allocation9 [shape = 's32[1]{0}', space=sflag, size = 0x4, scoped, tag = 'scoped memory for tpu_custom_call.1']
    %9 = vsyncpa [#allocation3], 0
    %10 = vsyncpa [#allocation6], 0
    %11 = vsyncpa [#allocation4], 0
    %12 = vsyncpa [#allocation9], 0
    // Predicated region
    $region2: #{tpu_custom_call.1} parent=1 // pred_check
      _
    $region3: #{tpu_custom_call.1} parent=1 // pred_check_branch
      %14 = sbr.rel (0) target = $region5
    $region4: #{tpu_custom_call.1} parent=1 // pred_region
      %s15 = sadd.s32 0, 0
      %s17 = ssub.s32 256, 256
      %18 = vsyncadd [#allocation3], %s17
      %s19 = smul.addr %s15, 128
      %s20 = scalar_lea.hbm %s0, %s19
      %s21 = sshll.u32 [#allocation2], 4
      %s22 = int_to_ptr.vmem [resolvable:$true] %s21
      %27 = dma.hbm_to_vmem [thread:$0]  %s20, 256, %s22, [#allocation3], 128, 128, 8
    $region5: #{tpu_custom_call.1} parent=1 // pred_fallthru
      _
    // Predicated region
    $region6: #{tpu_custom_call.1} parent=1 // pred_check
      _
    $region7: #{tpu_custom_call.1} parent=1 // pred_check_branch
      %29 = sbr.rel (0) target = $region9
    $region8: #{tpu_custom_call.1} parent=1 // pred_region
      %s30 = sadd.s32 0, 0
      %s32 = ssub.s32 256, 256
      %33 = vsyncadd [#allocation6], %s32
      %s34 = smul.addr %s30, 128
      %s35 = scalar_lea.hbm %s1, %s34
      %s36 = sshll.u32 [#allocation5], 4
      %s37 = int_to_ptr.vmem [resolvable:$true] %s36
      %42 = dma.hbm_to_vmem [thread:$0]  %s35, 256, %s37, [#allocation6], 128, 128, 8
    $region9: #{tpu_custom_call.1} parent=1 // pred_fallthru
      _
    // Predicated region
    $region10: #{tpu_custom_call.1} parent=1 // pred_check
      _
    $region11: #{tpu_custom_call.1} parent=1 // pred_check_branch
      %44 = sbr.rel (0) target = $region13
    $region12: #{tpu_custom_call.1} parent=1 // pred_region
      %45 = dma.done [#allocation3], 256
    $region13: #{tpu_custom_call.1} parent=1 // pred_fallthru
      _
    // Predicated region
    $region14: #{tpu_custom_call.1} parent=1 // pred_check
      _
    $region15: #{tpu_custom_call.1} parent=1 // pred_check_branch
      %47 = sbr.rel (0) target = $region17
    $region16: #{tpu_custom_call.1} parent=1 // pred_region
      %48 = dma.done [#allocation6], 256
    $region17: #{tpu_custom_call.1} parent=1 // pred_fallthru
      _
    %s49 = sadd.s32 0, 0
    %s50 = sadd.s32 0, 0
    %p51 = scmp.eq.s32.totalorder 0, 0
    // Predicated region
    $region18: #{tpu_custom_call.1} parent=1 // pred_check
      %p52 = pneg %p51
    $region19: #{tpu_custom_call.1} parent=1 // pred_check_branch
      %54 = sbr.rel (%p52) target = $region21
    $region20: #{tpu_custom_call.1} parent=1 // pred_region
      %55 = vst [vmem:[#allocation7] sm:$0x3] 0.0
      %56 = vst [vmem:[#allocation8] sm:$0x3] 0.0
    $region21: #{tpu_custom_call.1} parent=1 // pred_fallthru
      _
    %s57 = sadd.s32 0, 0
    %s58 = smul.u32 %s57, 8
    %s59 = sadd.s32 %s58, 8
    %p60 = scmp.le.s32.totalorder %s59, 8
    // Predicated region
    $region22: #{tpu_custom_call.1} parent=1 // pred_check
      %p61 = pneg %p60
    $region23: #{tpu_custom_call.1} parent=1 // pred_check_branch
      %63 = sbr.rel (%p61) target = $region25
    $region24: #{tpu_custom_call.1} parent=1 // pred_region
      %v64 = vld [vmem:[#allocation2] sm:$0xff]
      %v65 = vld [vmem:[#allocation2 + $0x8] sm:$0xff]
      %v66 = vld [vmem:[#allocation5] sm:$0xff]
      %v67 = vld [vmem:[#allocation5 + $0x8] sm:$0xff]
      %v68 = vsub.f32 %v64, %v66
      %v69 = vsub.f32 %v65, %v67
      %v70 = vld [vmem:[#allocation7] sm:$0x3]
      %v71 = vmul.f32 %v68, %v68
      %v72 = vmul.f32 %v69, %v69
      %v73 = vrot.slane %v71, 4
      %v74 = vadd.f32 %v71, %v73
      %v75 = vrot.slane %v74, 2
      %v76 = vadd.f32 %v74, %v75
      %v77 = vrot.slane %v76, 1
      %v78 = vadd.f32 %v76, %v77
      %v79 = vrot.slane %v72, 4
      %v80 = vadd.f32 %v72, %v79
      %v81 = vrot.slane %v80, 2
      %v82 = vadd.f32 %v80, %v81
      %v83 = vrot.slane %v82, 1
      %v84 = vadd.f32 %v82, %v83
      %vm87 = vcmask 1041409
      %v88 = vsel %vm87, %v84, %v78
      %v90 = vadd.f32 %v70, %v88
      %91 = vst [vmem:[#allocation7] sm:$0x3] %v90
      %v92 = vld [vmem:[#allocation8] sm:$0x3]
      %v93 = vmul.f32 %v66, %v66
      %v94 = vmul.f32 %v67, %v67
      %v95 = vrot.slane %v93, 4
      %v96 = vadd.f32 %v93, %v95
      %v97 = vrot.slane %v96, 2
      %v98 = vadd.f32 %v96, %v97
      %v99 = vrot.slane %v98, 1
      %v100 = vadd.f32 %v98, %v99
      %v101 = vrot.slane %v94, 4
      %v102 = vadd.f32 %v94, %v101
      %v103 = vrot.slane %v102, 2
      %v104 = vadd.f32 %v102, %v103
      %v105 = vrot.slane %v104, 1
      %v106 = vadd.f32 %v104, %v105
      %v109 = vsel %vm87, %v106, %v100
      %v111 = vadd.f32 %v92, %v109
      %112 = vst [vmem:[#allocation8] sm:$0x3] %v111
    $region25: #{tpu_custom_call.1} parent=1 // pred_fallthru
      _
    %p113 = scmp.gt.s32.totalorder %s59, 8
    // Predicated region
    $region26: #{tpu_custom_call.1} parent=1 // pred_check
      %p114 = pneg %p113
    $region27: #{tpu_custom_call.1} parent=1 // pred_check_branch
      %116 = sbr.rel (%p114) target = $region29
    $region28: #{tpu_custom_call.1} parent=1 // pred_region
      %v117 = vld [vmem:[#allocation2] sm:$0xff]
      %v118 = vld [vmem:[#allocation2 + $0x8] sm:$0xff]
      %v119 = vld [vmem:[#allocation5] sm:$0xff]
      %v120 = vld [vmem:[#allocation5 + $0x8] sm:$0xff]
      %v121 = vsub.f32 %v117, %v119
      %v122 = vsub.f32 %v118, %v120
      %v123 = vlaneseq
      %v124 = vshrl.u32 %v123, 7
      %v125 = vstv %s58
      %v126 = vadd.s32 %v124, %v125
      %vm127 = vcmp.lt.s32.totalorder %v126, 8
      %v128 = vsel %vm127, %v121, 0.0
      %v129 = vsel %vm127, %v122, 0.0
      %v130 = vsel %vm127, %v119, 0.0
      %v131 = vsel %vm127, %v120, 0.0
      %v132 = vld [vmem:[#allocation7] sm:$0x3]
      %v133 = vmul.f32 %v128, %v128
      %v134 = vmul.f32 %v129, %v129
      %v135 = vrot.slane %v133, 4
      %v136 = vadd.f32 %v133, %v135
      %v137 = vrot.slane %v136, 2
      %v138 = vadd.f32 %v136, %v137
      %v139 = vrot.slane %v138, 1
      %v140 = vadd.f32 %v138, %v139
      %v141 = vrot.slane %v134, 4
      %v142 = vadd.f32 %v134, %v141
      %v143 = vrot.slane %v142, 2
      %v144 = vadd.f32 %v142, %v143
      %v145 = vrot.slane %v144, 1
      %v146 = vadd.f32 %v144, %v145
      %vm149 = vcmask 1041409
      %v150 = vsel %vm149, %v146, %v140
      %v152 = vadd.f32 %v132, %v150
      %153 = vst [vmem:[#allocation7] sm:$0x3] %v152
      %v154 = vld [vmem:[#allocation8] sm:$0x3]
      %v155 = vmul.f32 %v130, %v130
      %v156 = vmul.f32 %v131, %v131
      %v157 = vrot.slane %v155, 4
      %v158 = vadd.f32 %v155, %v157
      %v159 = vrot.slane %v158, 2
      %v160 = vadd.f32 %v158, %v159
      %v161 = vrot.slane %v160, 1
      %v162 = vadd.f32 %v160, %v161
      %v163 = vrot.slane %v156, 4
      %v164 = vadd.f32 %v156, %v163
      %v165 = vrot.slane %v164, 2
      %v166 = vadd.f32 %v164, %v165
      %v167 = vrot.slane %v166, 1
      %v168 = vadd.f32 %v166, %v167
      %v171 = vsel %vm149, %v168, %v162
      %v173 = vadd.f32 %v154, %v171
      %174 = vst [vmem:[#allocation8] sm:$0x3] %v173
    $region29: #{tpu_custom_call.1} parent=1 // pred_fallthru
      _
    // Predicated region
    $region30: #{tpu_custom_call.1} parent=1 // pred_check
      _
    $region31: #{tpu_custom_call.1} parent=1 // pred_check_branch
      %176 = sbr.rel (0) target = $region33
    $region32: #{tpu_custom_call.1} parent=1 // pred_region
      %s178 = ssub.s32 32, 32
      %179 = vsyncadd [#allocation4], %s178
      %s181 = sshll.u32 [#allocation7], 4
      %s182 = int_to_ptr.vmem [resolvable:$true] %s181
      %184 = dma.vmem_to_hbm [thread:$0]  %s182, 32, %s2, [#allocation4]
    $region33: #{tpu_custom_call.1} parent=1 // pred_fallthru
      _
    // Predicated region
    $region34: #{tpu_custom_call.1} parent=1 // pred_check
      _
    $region35: #{tpu_custom_call.1} parent=1 // pred_check_branch
      %186 = sbr.rel (0) target = $region37
    $region36: #{tpu_custom_call.1} parent=1 // pred_region
      %s188 = ssub.s32 32, 32
      %189 = vsyncadd [#allocation9], %s188
      %s191 = sshll.u32 [#allocation8], 4
      %s192 = int_to_ptr.vmem [resolvable:$true] %s191
      %194 = dma.vmem_to_hbm [thread:$0]  %s192, 32, %s3, [#allocation9]
    $region37: #{tpu_custom_call.1} parent=1 // pred_fallthru
      _
    // Predicated region
    $region38: #{tpu_custom_call.1} parent=1 // pred_check
      _
    $region39: #{tpu_custom_call.1} parent=1 // pred_check_branch
      %196 = sbr.rel (0) target = $region41
    $region40: #{tpu_custom_call.1} parent=1 // pred_region
      %197 = dma.done [#allocation4], 32
    $region41: #{tpu_custom_call.1} parent=1 // pred_fallthru
      _
    // Predicated region
    $region42: #{tpu_custom_call.1} parent=1 // pred_check
      _
    $region43: #{tpu_custom_call.1} parent=1 // pred_check_branch
      %199 = sbr.rel (0) target = $region45
    $region44: #{tpu_custom_call.1} parent=1 // pred_region
      %200 = dma.done [#allocation9], 32
    $region45: #{tpu_custom_call.1} parent=1 // pred_fallthru
      _
    %201 = vsyncpa [#allocation3], 1
    %202 = vsyncpa [#allocation6], 1
    %203 = vsyncpa [#allocation4], 1
    %204 = vsyncpa [#allocation9], 1

</llo_original>
